<compile_context>
chip_gen: v6e
topology: v6e:2x2x1
jax: 0.10.0
libtpu: 0.0.40
codegen_flags: <defaults>
</compile_context>

<pallas_src>
import functools

import jax
import jax.numpy as jnp
from jax.experimental import pallas as pl
from jax.experimental.pallas import tpu as pltpu

NODE_FEATURES = 4
HIDDEN = 32
NUM_CLASSES = 8
NUM_NODES = 16
SEQ_LEN = 8
LANE = 128  # classifier output padded to a full lane tile (lane-dense stores)


# ---------------------------------------------------------------------------
# Kernel: one TGCN step per grid iteration, H carried in a resident output block
# ---------------------------------------------------------------------------
def _tgcn_seq_kernel(a_ref, x_ref, h0_ref, w_cat_ref, w_hr_ref, w_lin_ref,
                     b_g_ref, b_lin_ref, out_ref, h_ref, *, n, f, hid, cpad):
    """Refs (all VMEM):
      a_ref     [n, n]          bf16  normalized adjacency (constant index map, resident)
      x_ref     [1, n, f]       bf16  this step's node features (double-buffered over t)
      h0_ref    [n, hid]        f32   initial hidden state
      w_cat_ref [f+hid, 3*hid]  bf16  fused [AX | H] gate weight (z | r | candidate cols)
      w_hr_ref  [hid, hid]      bf16  candidate-gate weight acting on H*R
      w_lin_ref [hid, cpad]     bf16  classifier weight, zero-padded to 128 lanes
      b_g_ref   [1, 3*hid]      f32   folded gate biases
      b_lin_ref [1, cpad]       f32   classifier bias, -1e30 in padded lanes
      out_ref   [1, n, cpad]    f32   per-step softmax probs (lane-dense block)
      h_ref     [n, hid]        f32   hidden state, resident across the time axis
    """
    t = pl.program_id(0)

    @pl.when(t == 0)
    def _():
        h_ref[...] = h0_ref[...]          # init carried state once

    h = h_ref[...]                        # [n, hid] f32 (state from step t-1)

    # Shared GCN propagation: A_hat @ X_t   (bf16 operands, f32 accumulate)
    ax = jnp.dot(a_ref[...], x_ref[0], preferred_element_type=jnp.float32)   # [n, f]

    # Fused gate matmul: [AX | H] @ [[Wz_eff|Wr_eff|Wh_eff],[Wz_bot|Wr_bot|0]] + b
    cat = jnp.concatenate([ax, h], axis=1).astype(jnp.bfloat16)              # [n, f+hid]
    g = jnp.dot(cat, w_cat_ref[...], preferred_element_type=jnp.float32) + b_g_ref[...]

    def _sigmoid(v):                      # single EUP op (tanh); no exp + reciprocal
        return 0.5 * (jnp.tanh(0.5 * v) + 1.0)

    z = _sigmoid(g[:, :hid])              # update gate
    r = _sigmoid(g[:, hid:2 * hid])       # reset gate

    # Candidate state (depends on H*R -> must be its own matmul)
    hr = (h * r).astype(jnp.bfloat16)
    h_pre = g[:, 2 * hid:3 * hid] + jnp.dot(hr, w_hr_ref[...],
                                            preferred_element_type=jnp.float32)
    h_tilde = jnp.tanh(h_pre)

    h_new = z * h + (1.0 - z) * h_tilde
    h_ref[...] = h_new                    # carry state to step t+1 (resident block)

    # relu -> Linear (classes padded to 128 lanes) -> softmax over the class dim
    h_relu = jnp.maximum(h_new, 0.0).astype(jnp.bfloat16)
    logits = (jnp.dot(h_relu, w_lin_ref[...], preferred_element_type=jnp.float32)
              + b_lin_ref[...])
    m = jnp.max(logits, axis=1, keepdims=True)
    e = jnp.exp(logits - m)               # padded lanes: exp(-1e30 - m) == 0 exactly
    denom = jnp.sum(e, axis=1, keepdims=True)
    out_ref[0] = e * pl.reciprocal(denom, approx=False)   # exact: rows sum to 1 at f32


# ---------------------------------------------------------------------------
# Host-side parameter folding / packing (done once)
# ---------------------------------------------------------------------------
def prepare_packed_params(params):
    """Fold GCNConv weights into the gate linears, fuse the AX/H paths, pad classifier."""
    f, hid, c = NODE_FEATURES, HIDDEN, NUM_CLASSES

    def fold(wg, bg, wl, bl):
        w_top, w_bot = wl[:hid, :], wl[hid:, :]     # top acts on conv output, bottom on H
        return wg @ w_top, bg @ w_top + bl, w_bot   # W_eff [f,hid], b_eff [1,hid]

    wz_eff, bz_eff, wz_bot = fold(params["wz"], params["bz"], params["wlz"], params["blz"])
    wr_eff, br_eff, wr_bot = fold(params["wr"], params["br"], params["wlr"], params["blr"])
    wh_eff, bh_eff, wh_bot = fold(params["wh"], params["bh"], params["wlh"], params["blh"])

    w_ax = jnp.concatenate([wz_eff, wr_eff, wh_eff], axis=1)                   # [f, 3h]
    w_hz = jnp.concatenate([wz_bot, wr_bot, jnp.zeros((hid, hid), jnp.float32)], axis=1)
    w_cat = jnp.concatenate([w_ax, w_hz], axis=0).astype(jnp.bfloat16)         # [f+h, 3h]
    w_hr = wh_bot.astype(jnp.bfloat16)                                         # [h, h]
    w_lin = jnp.pad(params["wlin"], ((0, 0), (0, LANE - c))).astype(jnp.bfloat16)  # [h,128]
    b_g = jnp.concatenate([bz_eff, br_eff, bh_eff], axis=1)                    # [1, 3h] f32
    b_lin = jnp.concatenate(
        [params["blin"], jnp.full((1, LANE - c), -1e30, jnp.float32)], axis=1)  # [1,128]
    return {"w_cat": w_cat, "w_hr": w_hr, "w_lin": w_lin, "b_g": b_g, "b_lin": b_lin}


# ---------------------------------------------------------------------------
# Wrappers
# ---------------------------------------------------------------------------
def tgcn_sequence_forward(packed, a_hat, x_seq, h0=None):
    """Run T TGCN steps in ONE pallas_call (weights VMEM-resident, H carried in-kernel).

    Returns (probs [T, N, NUM_CLASSES], h_last [N, HIDDEN])."""
    t_steps, n, f = x_seq.shape
    hid, cpad = HIDDEN, LANE
    if h0 is None:
        h0 = jnp.zeros((n, hid), jnp.float32)

    kernel = functools.partial(_tgcn_seq_kernel, n=n, f=f, hid=hid, cpad=cpad)
    const2 = lambda t: (0, 0)

    probs_pad, h_last = pl.pallas_call(
        kernel,
        out_shape=(jax.ShapeDtypeStruct((t_steps, n, cpad), jnp.float32),
                   jax.ShapeDtypeStruct((n, hid), jnp.float32)),
        grid_spec=pltpu.PrefetchScalarGridSpec(
            num_scalar_prefetch=0,
            grid=(t_steps,),
            in_specs=[
                pl.BlockSpec((n, n), const2),                       # A_hat    (resident)
                pl.BlockSpec((1, n, f), lambda t: (t, 0, 0),
                             pipeline_mode=pl.Buffered(2)),         # X_t (double-buffered)
                pl.BlockSpec((n, hid), const2),                     # H0       (resident)
                pl.BlockSpec((f + hid, 3 * hid), const2),           # W_cat    (resident)
                pl.BlockSpec((hid, hid), const2),                   # W_hr     (resident)
                pl.BlockSpec((hid, cpad), const2),                  # W_lin    (resident)
                pl.BlockSpec((1, 3 * hid), const2),                 # b_gates  (resident)
                pl.BlockSpec((1, cpad), const2),                    # b_lin    (resident)
            ],
            out_specs=(
                pl.BlockSpec((1, n, cpad), lambda t: (t, 0, 0)),    # per-step probs
                pl.BlockSpec((n, hid), const2),                     # carried H (resident)
            ),
        ),
        compiler_params=pltpu.CompilerParams(
            dimension_semantics=("arbitrary",)),                    # recurrent over time
    )(a_hat.astype(jnp.bfloat16), x_seq.astype(jnp.bfloat16), h0,
      packed["w_cat"], packed["w_hr"], packed["w_lin"], packed["b_g"], packed["b_lin"])
    # TODO(synk): for batched graphs/sequences, add a leading "parallel" grid axis
    # (re-init H at t==0 per batch) so v7x megacore shards work across both TensorCores,
    # and batch node rows toward the MXU's native height.
    return probs_pad[:, :, :NUM_CLASSES], h_last


def tgcn_recurrent_gcn_forward(packed, a_hat, x, H=None):
    """Module-equivalent single step: returns (softmax probs [N, C], H-input unchanged)."""
    probs_seq, _ = tgcn_sequence_forward(packed, a_hat, x[None], H)
    return probs_seq[0], H


# ---------------------------------------------------------------------------
# Graph preprocessing, init & pure-JAX reference (outside the kernel)
# ---------------------------------------------------------------------------
def build_gcn_adjacency(edge_index, edge_weight, num_nodes):
    """Dense D^{-1/2} (A + I) D^{-1/2}, matching PyG gcn_norm (add_self_loops=True)."""
    src, dst = edge_index[0], edge_index[1]
    loops = jnp.arange(num_nodes, dtype=src.dtype)
    src = jnp.concatenate([src, loops])
    dst = jnp.concatenate([dst, loops])
    w = jnp.concatenate([edge_weight, jnp.ones((num_nodes,), edge_weight.dtype)])
    deg = jnp.zeros((num_nodes,), edge_weight.dtype).at[dst].add(w)
    dinv = jnp.where(deg > 0, 1.0 / jnp.sqrt(deg), 0.0)
    norm = dinv[src] * w * dinv[dst]
    return jnp.zeros((num_nodes, num_nodes), edge_weight.dtype).at[dst, src].add(norm)


def init_params(key, node_features, hidden, num_classes):
    ks = jax.random.split(key, 12)
    s = 0.1
    p = {
        "wz": jax.random.normal(ks[0], (node_features, hidden), jnp.float32) * s,
        "bz": jax.random.normal(ks[1], (1, hidden), jnp.float32) * s,
        "wr": jax.random.normal(ks[2], (node_features, hidden), jnp.float32) * s,
        "br": jax.random.normal(ks[3], (1, hidden), jnp.float32) * s,
        "wh": jax.random.normal(ks[4], (node_features, hidden), jnp.float32) * s,
        "bh": jax.random.normal(ks[5], (1, hidden), jnp.float32) * s,
        "wlz": jax.random.normal(ks[6], (2 * hidden, hidden), jnp.float32) * s,
        "blz": jax.random.normal(ks[7], (1, hidden), jnp.float32) * s,
        "wlr": jax.random.normal(ks[8], (2 * hidden, hidden), jnp.float32) * s,
        "blr": jax.random.normal(ks[9], (1, hidden), jnp.float32) * s,
        "wlh": jax.random.normal(ks[10], (2 * hidden, hidden), jnp.float32) * s,
        "blh": jax.random.normal(ks[11], (1, hidden), jnp.float32) * s,
    }
    k_lin = jax.random.split(jax.random.fold_in(key, 99), 2)
    p["wlin"] = jax.random.normal(k_lin[0], (hidden, num_classes), jnp.float32) * s
    p["blin"] = jax.random.normal(k_lin[1], (1, num_classes), jnp.float32) * s
    return p


def tgcn_reference_step(params, a_hat, x, h):
    """Unfolded f32 reference of one TGCN_RecurrentGCN forward step."""
    ax = a_hat @ x

    def gate(wg, bg, wl, bl, state):
        return jnp.concatenate([ax @ wg + bg, state], axis=1) @ wl + bl

    z = jax.nn.sigmoid(gate(params["wz"], params["bz"], params["wlz"], params["blz"], h))
    r = jax.nn.sigmoid(gate(params["wr"], params["br"], params["wlr"], params["blr"], h))
    h_tilde = jnp.tanh(gate(params["wh"], params["bh"], params["wlh"], params["blh"], h * r))
    h_new = z * h + (1.0 - z) * h_tilde
    logits = jnp.maximum(h_new, 0.0) @ params["wlin"] + params["blin"]
    return jax.nn.softmax(logits, axis=1), h_new


def tgcn_reference_seq(params, a_hat, x_seq, h0):
    h, outs = h0, []
    for t in range(x_seq.shape[0]):
        p, h = tgcn_reference_step(params, a_hat, x_seq[t], h)
        outs.append(p)
    return jnp.stack(outs), h


if __name__ == "__main__":
    key = jax.random.PRNGKey(0)
    k_x, k_w, k_p = jax.random.split(key, 3)

    n = NUM_NODES
    # Sequence of node features [T, N, F]
    x_seq = jax.random.normal(k_x, (SEQ_LEN, n, NODE_FEATURES), jnp.float32)

    # Bidirectional ring graph
    fwd = jnp.stack([jnp.arange(n), (jnp.arange(n) + 1) % n])
    bwd = jnp.stack([(jnp.arange(n) + 1) % n, jnp.arange(n)])
    edge_index = jnp.concatenate([fwd, bwd], axis=1).astype(jnp.int32)
    edge_weight = jax.random.uniform(k_w, (edge_index.shape[1],), jnp.float32,
                                     minval=0.5, maxval=1.5)

    a_hat = build_gcn_adjacency(edge_index, edge_weight, n)
    params = init_params(k_p, NODE_FEATURES, HIDDEN, NUM_CLASSES)
    packed = prepare_packed_params(params)      # one-time folding / fusion / padding

    # --- single step: exact semantics of TGCN_RecurrentGCN.forward (returns input H) ---
    probs, H_out = tgcn_recurrent_gcn_forward(packed, a_hat, x_seq[0], H=None)
    probs = jax.block_until_ready(probs)
    assert probs.shape == (n, NUM_CLASSES)
    assert H_out is None
    assert bool(jnp.all(jnp.isfinite(probs)))
    assert bool(jnp.allclose(jnp.sum(probs, axis=1), 1.0, atol=1e-4))   # exact reciprocal
    ref_step, _ = tgcn_reference_step(params, a_hat, x_seq[0],
                                      jnp.zeros((n, HIDDEN), jnp.float32))
    assert bool(jnp.allclose(probs, ref_step, atol=5e-3, rtol=5e-3))    # bf16 MXU operands

    # --- full sequence: one pallas_call, grid=(T,), weights resident, H carried in VMEM ---
    probs_seq, h_last = tgcn_sequence_forward(packed, a_hat, x_seq, h0=None)
    probs_seq = jax.block_until_ready(probs_seq)
    h_last = jax.block_until_ready(h_last)
    ref_seq, ref_h = tgcn_reference_seq(params, a_hat, x_seq,
                                        jnp.zeros((n, HIDDEN), jnp.float32))
    assert probs_seq.shape == (SEQ_LEN, n, NUM_CLASSES)
    assert bool(jnp.all(jnp.isfinite(probs_seq)))
    assert bool(jnp.allclose(jnp.sum(probs_seq, axis=-1), 1.0, atol=1e-4))
    assert bool(jnp.allclose(probs_seq, ref_seq, atol=1e-2, rtol=1e-2))
    assert bool(jnp.allclose(h_last, ref_h, atol=1e-2, rtol=1e-2))

    print("KERNEL_OK")
</pallas_src>

<mosaic_0001>
module attributes {stable_mosaic.version = 11 : i64} {
  func.func @_tgcn_seq_kernel(%arg0: i32, %arg1: memref<16x16xbf16, #tpu.memory_space<vmem>>, %arg2: memref<1x16x4xbf16, #tpu.memory_space<vmem>>, %arg3: memref<16x32xf32, #tpu.memory_space<vmem>>, %arg4: memref<36x96xbf16, #tpu.memory_space<vmem>>, %arg5: memref<32x32xbf16, #tpu.memory_space<vmem>>, %arg6: memref<32x128xbf16, #tpu.memory_space<vmem>>, %arg7: memref<1x96xf32, #tpu.memory_space<vmem>>, %arg8: memref<1x128xf32, #tpu.memory_space<vmem>>, %arg9: memref<1x16x128xf32, #tpu.memory_space<vmem>>, %arg10: memref<16x32xf32, #tpu.memory_space<vmem>>) attributes {dimension_semantics = [#tpu.dimension_semantics<arbitrary>], iteration_bounds = array<i64: 1>, scalar_prefetch = 0 : i64, scratch_operands = 0 : i64, tpu.core_type = #tpu.core_type<tc>, window_params = [{pipeline_mode = #tpu.pipeline_mode<synchronous>, transform_indices = @transform_0, window_bounds = array<i64: 16, 16>}, {pipeline_mode = #tpu.pipeline_mode<double_buffered>, transform_indices = @transform_1, window_bounds = array<i64: 1, 16, 4>}, {pipeline_mode = #tpu.pipeline_mode<synchronous>, transform_indices = @transform_2, window_bounds = array<i64: 16, 32>}, {pipeline_mode = #tpu.pipeline_mode<synchronous>, transform_indices = @transform_3, window_bounds = array<i64: 36, 96>}, {pipeline_mode = #tpu.pipeline_mode<synchronous>, transform_indices = @transform_4, window_bounds = array<i64: 32, 32>}, {pipeline_mode = #tpu.pipeline_mode<synchronous>, transform_indices = @transform_5, window_bounds = array<i64: 32, 128>}, {pipeline_mode = #tpu.pipeline_mode<synchronous>, transform_indices = @transform_6, window_bounds = array<i64: 1, 96>}, {pipeline_mode = #tpu.pipeline_mode<synchronous>, transform_indices = @transform_7, window_bounds = array<i64: 1, 128>}, {transform_indices = @transform_8, window_bounds = array<i64: 1, 16, 128>}, {pipeline_mode = #tpu.pipeline_mode<synchronous>, transform_indices = @transform_9, window_bounds = array<i64: 16, 32>}]} {
    %c0_i32 = arith.constant 0 : i32
    %0 = arith.cmpi eq, %arg0, %c0_i32 : i32
    %1 = arith.extui %0 : i1 to i32
    %c0_i32_0 = arith.constant 0 : i32
    %2 = arith.cmpi ne, %1, %c0_i32_0 : i32
    scf.if %2 {
      %c0_35 = arith.constant 0 : index
      %c0_36 = arith.constant 0 : index
      %65 = vector.load %arg3[%c0_35, %c0_36] : memref<16x32xf32, #tpu.memory_space<vmem>>, vector<16x32xf32>
      %c0_37 = arith.constant 0 : index
      %c0_38 = arith.constant 0 : index
      %66 = vector.load %arg10[%c0_37, %c0_38] : memref<16x32xf32, #tpu.memory_space<vmem>>, vector<16x32xf32>
      tpu.vector_store %arg10[%c0_37, %c0_38], %65 {strides = array<i32>} : memref<16x32xf32, #tpu.memory_space<vmem>>, vector<16x32xf32>,
    } else {
    }
    %c0 = arith.constant 0 : index
    %c0_1 = arith.constant 0 : index
    %3 = vector.load %arg10[%c0, %c0_1] : memref<16x32xf32, #tpu.memory_space<vmem>>, vector<16x32xf32>
    %c0_2 = arith.constant 0 : index
    %c0_3 = arith.constant 0 : index
    %4 = vector.load %arg1[%c0_2, %c0_3] : memref<16x16xbf16, #tpu.memory_space<vmem>>, vector<16x16xbf16>
    %c0_4 = arith.constant 0 : index
    %c0_5 = arith.constant 0 : index
    %c0_6 = arith.constant 0 : index
    %5 = vector.load %arg2[%c0_4, %c0_5, %c0_6] : memref<1x16x4xbf16, #tpu.memory_space<vmem>>, vector<1x16x4xbf16>
    %6 = vector.shape_cast %5 : vector<1x16x4xbf16> to vector<16x4xbf16>
    %cst = arith.constant dense<0.000000e+00> : vector<16x4xf32>
    %7 = tpu.matmul %4, %6, %cst {dimension_numbers = #tpu.dot_dimension_numbers<[1], [0], [0], [1], [0, 0, 1, 1], [], []>} : vector<16x16xbf16>, vector<16x4xbf16>, vector<16x4xf32> -> vector<16x4xf32>
    %8 = tpu.concatenate %7, %3 in 1 : vector<16x4xf32>, vector<16x32xf32> -> vector<16x36xf32>
    %9 = arith.truncf %8 : vector<16x36xf32> to vector<16x36xbf16>
    %c0_7 = arith.constant 0 : index
    %c0_8 = arith.constant 0 : index
    %10 = vector.load %arg4[%c0_7, %c0_8] : memref<36x96xbf16, #tpu.memory_space<vmem>>, vector<36x96xbf16>
    %cst_9 = arith.constant dense<0.000000e+00> : vector<16x96xf32>
    %11 = tpu.matmul %9, %10, %cst_9 {dimension_numbers = #tpu.dot_dimension_numbers<[1], [0], [0], [1], [0, 0, 1, 1], [], []>} : vector<16x36xbf16>, vector<36x96xbf16>, vector<16x96xf32> -> vector<16x96xf32>
    %c0_10 = arith.constant 0 : index
    %c0_11 = arith.constant 0 : index
    %12 = vector.load %arg7[%c0_10, %c0_11] : memref<1x96xf32, #tpu.memory_space<vmem>>, vector<1x96xf32>
    %13 = vector.broadcast %12 : vector<1x96xf32> to vector<16x96xf32>
    %14 = arith.addf %11, %13 : vector<16x96xf32>
    %15 = vector.extract_strided_slice %14 {offsets = [0, 0], sizes = [16, 32], strides = [1, 1]} : vector<16x96xf32> to vector<16x32xf32>
    %cst_12 = arith.constant 5.000000e-01 : f32
    %16 = vector.broadcast %cst_12 : f32 to vector<16x32xf32>
    %17 = arith.mulf %16, %15 : vector<16x32xf32>
    %18 = math.tanh %17 : vector<16x32xf32>
    %cst_13 = arith.constant 1.000000e+00 : f32
    %19 = vector.broadcast %cst_13 : f32 to vector<16x32xf32>
    %20 = arith.addf %18, %19 : vector<16x32xf32>
    %cst_14 = arith.constant 5.000000e-01 : f32
    %21 = vector.broadcast %cst_14 : f32 to vector<16x32xf32>
    %22 = arith.mulf %21, %20 : vector<16x32xf32>
    %23 = vector.extract_strided_slice %14 {offsets = [0, 32], sizes = [16, 32], strides = [1, 1]} : vector<16x96xf32> to vector<16x32xf32>
    %cst_15 = arith.constant 5.000000e-01 : f32
    %24 = vector.broadcast %cst_15 : f32 to vector<16x32xf32>
    %25 = arith.mulf %24, %23 : vector<16x32xf32>
    %26 = math.tanh %25 : vector<16x32xf32>
    %cst_16 = arith.constant 1.000000e+00 : f32
    %27 = vector.broadcast %cst_16 : f32 to vector<16x32xf32>
    %28 = arith.addf %26, %27 : vector<16x32xf32>
    %cst_17 = arith.constant 5.000000e-01 : f32
    %29 = vector.broadcast %cst_17 : f32 to vector<16x32xf32>
    %30 = arith.mulf %29, %28 : vector<16x32xf32>
    %31 = arith.mulf %3, %30 : vector<16x32xf32>
    %32 = arith.truncf %31 : vector<16x32xf32> to vector<16x32xbf16>
    %33 = vector.extract_strided_slice %14 {offsets = [0, 64], sizes = [16, 32], strides = [1, 1]} : vector<16x96xf32> to vector<16x32xf32>
    %c0_18 = arith.constant 0 : index
    %c0_19 = arith.constant 0 : index
    %34 = vector.load %arg5[%c0_18, %c0_19] : memref<32x32xbf16, #tpu.memory_space<vmem>>, vector<32x32xbf16>
    %cst_20 = arith.constant dense<0.000000e+00> : vector<16x32xf32>
    %35 = tpu.matmul %32, %34, %cst_20 {dimension_numbers = #tpu.dot_dimension_numbers<[1], [0], [0], [1], [0, 0, 1, 1], [], []>} : vector<16x32xbf16>, vector<32x32xbf16>, vector<16x32xf32> -> vector<16x32xf32>
    %36 = arith.addf %33, %35 : vector<16x32xf32>
    %37 = math.tanh %36 : vector<16x32xf32>
    %38 = arith.mulf %22, %3 : vector<16x32xf32>
    %cst_21 = arith.constant 1.000000e+00 : f32
    %39 = vector.broadcast %cst_21 : f32 to vector<16x32xf32>
    %40 = arith.subf %39, %22 : vector<16x32xf32>
    %41 = arith.mulf %40, %37 : vector<16x32xf32>
    %42 = arith.addf %38, %41 : vector<16x32xf32>
    %c0_22 = arith.constant 0 : index
    %c0_23 = arith.constant 0 : index
    %43 = vector.load %arg10[%c0_22, %c0_23] : memref<16x32xf32, #tpu.memory_space<vmem>>, vector<16x32xf32>
    tpu.vector_store %arg10[%c0_22, %c0_23], %42 {strides = array<i32>} : memref<16x32xf32, #tpu.memory_space<vmem>>, vector<16x32xf32>,
    %cst_24 = arith.constant 0.000000e+00 : f32
    %44 = vector.broadcast %cst_24 : f32 to vector<16x32xf32>
    %45 = arith.maximumf %42, %44 : vector<16x32xf32>
    %46 = arith.truncf %45 : vector<16x32xf32> to vector<16x32xbf16>
    %c0_25 = arith.constant 0 : index
    %c0_26 = arith.constant 0 : index
    %47 = vector.load %arg6[%c0_25, %c0_26] : memref<32x128xbf16, #tpu.memory_space<vmem>>, vector<32x128xbf16>
    %cst_27 = arith.constant dense<0.000000e+00> : vector<16x128xf32>
    %48 = tpu.matmul %46, %47, %cst_27 {dimension_numbers = #tpu.dot_dimension_numbers<[1], [0], [0], [1], [0, 0, 1, 1], [], []>} : vector<16x32xbf16>, vector<32x128xbf16>, vector<16x128xf32> -> vector<16x128xf32>
    %c0_28 = arith.constant 0 : index
    %c0_29 = arith.constant 0 : index
    %49 = vector.load %arg8[%c0_28, %c0_29] : memref<1x128xf32, #tpu.memory_space<vmem>>, vector<1x128xf32>
    %50 = vector.broadcast %49 : vector<1x128xf32> to vector<16x128xf32>
    %51 = arith.addf %48, %50 : vector<16x128xf32>
    %cst_30 = arith.constant dense<0xFF800000> : vector<16xf32>
    %52 = vector.multi_reduction <maximumf>, %51, %cst_30 [1] : vector<16x128xf32> to vector<16xf32>
    %53 = vector.shape_cast %52 : vector<16xf32> to vector<16x1xf32>
    %54 = vector.broadcast %53 : vector<16x1xf32> to vector<16x128xf32>
    %55 = arith.subf %51, %54 : vector<16x128xf32>
    %56 = math.exp %55 : vector<16x128xf32>
    %cst_31 = arith.constant dense<0.000000e+00> : vector<16xf32>
    %57 = vector.multi_reduction <add>, %56, %cst_31 [1] : vector<16x128xf32> to vector<16xf32>
    %58 = vector.shape_cast %57 : vector<16xf32> to vector<16x1xf32>
    %59 = tpu.reciprocal %58 : vector<16x1xf32> -> vector<16x1xf32>
    %60 = vector.broadcast %59 : vector<16x1xf32> to vector<16x128xf32>
    %61 = arith.mulf %56, %60 : vector<16x128xf32>
    %c0_32 = arith.constant 0 : index
    %c0_33 = arith.constant 0 : index
    %c0_34 = arith.constant 0 : index
    %62 = vector.load %arg9[%c0_32, %c0_33, %c0_34] : memref<1x16x128xf32, #tpu.memory_space<vmem>>, vector<1x16x128xf32>
    %63 = vector.shape_cast %62 : vector<1x16x128xf32> to vector<16x128xf32>
    %64 = vector.shape_cast %61 : vector<16x128xf32> to vector<1x16x128xf32>
    tpu.vector_store %arg9[%c0_32, %c0_33, %c0_34], %64 {strides = array<i32>} : memref<1x16x128xf32, #tpu.memory_space<vmem>>, vector<1x16x128xf32>,
    return
  }
  func.func @transform_0(%arg0: i32) -> (i32, i32) {
    %c0_i32 = arith.constant 0 : i32
    %c0_i32_0 = arith.constant 0 : i32
    %c0_i32_1 = arith.constant 0 : i32
    return %c0_i32, %c0_i32_0 : i32, i32
  }
  func.func @transform_1(%arg0: i32) -> (i32, i32, i32) {
    %c0_i32 = arith.constant 0 : i32
    %c0_i32_0 = arith.constant 0 : i32
    %c0_i32_1 = arith.constant 0 : i32
    return %arg0, %c0_i32, %c0_i32_0 : i32, i32, i32
  }
  func.func @transform_2(%arg0: i32) -> (i32, i32) {
    %c0_i32 = arith.constant 0 : i32
    %c0_i32_0 = arith.constant 0 : i32
    %c0_i32_1 = arith.constant 0 : i32
    return %c0_i32, %c0_i32_0 : i32, i32
  }
  func.func @transform_3(%arg0: i32) -> (i32, i32) {
    %c0_i32 = arith.constant 0 : i32
    %c0_i32_0 = arith.constant 0 : i32
    %c0_i32_1 = arith.constant 0 : i32
    return %c0_i32, %c0_i32_0 : i32, i32
  }
  func.func @transform_4(%arg0: i32) -> (i32, i32) {
    %c0_i32 = arith.constant 0 : i32
    %c0_i32_0 = arith.constant 0 : i32
    %c0_i32_1 = arith.constant 0 : i32
    return %c0_i32, %c0_i32_0 : i32, i32
  }
  func.func @transform_5(%arg0: i32) -> (i32, i32) {
    %c0_i32 = arith.constant 0 : i32
    %c0_i32_0 = arith.constant 0 : i32
    %c0_i32_1 = arith.constant 0 : i32
    return %c0_i32, %c0_i32_0 : i32, i32
  }
  func.func @transform_6(%arg0: i32) -> (i32, i32) {
    %c0_i32 = arith.constant 0 : i32
    %c0_i32_0 = arith.constant 0 : i32
    %c0_i32_1 = arith.constant 0 : i32
    return %c0_i32, %c0_i32_0 : i32, i32
  }
  func.func @transform_7(%arg0: i32) -> (i32, i32) {
    %c0_i32 = arith.constant 0 : i32
    %c0_i32_0 = arith.constant 0 : i32
    %c0_i32_1 = arith.constant 0 : i32
    return %c0_i32, %c0_i32_0 : i32, i32
  }
  func.func @transform_8(%arg0: i32) -> (i32, i32, i32) {
    %c0_i32 = arith.constant 0 : i32
    %c0_i32_0 = arith.constant 0 : i32
    %c0_i32_1 = arith.constant 0 : i32
    return %arg0, %c0_i32, %c0_i32_0 : i32, i32, i32
  }
  func.func @transform_9(%arg0: i32) -> (i32, i32) {
    %c0_i32 = arith.constant 0 : i32
    %c0_i32_0 = arith.constant 0 : i32
    %c0_i32_1 = arith.constant 0 : i32
    return %c0_i32, %c0_i32_0 : i32, i32
  }
}

</mosaic_0001>

<llo_original>
// kernel: tpu_custom_call.1
$region0: #{tpu_custom_call.1}
  #allocation0 [shape = 'u32[]', space=smem, size = 0x4, offset = 0x4, fixed_abs, tag = 'smem constant byte address 0x4 - core index']
  #allocation1 [shape = 'u32[144,128]{1,0:T(1,128)}', space=vmem, size = 0x12000, scoped, tag = 'internal scratch']
  %s0 = inlined_call_operand.hbm [shape: bf16[16,16], index: 0, kind: input, shape index: {}]
  %s1 = inlined_call_operand.vmem [shape: bf16[1,16,4], index: 1, kind: input, shape index: {}]
  %s2 = inlined_call_operand.hbm [shape: f32[16,32], index: 2, kind: input, shape index: {}]
  %s3 = inlined_call_operand.hbm [shape: bf16[36,96], index: 3, kind: input, shape index: {}]
  %s4 = inlined_call_operand.vmem [shape: bf16[32,32], index: 4, kind: input, shape index: {}]
  %s5 = inlined_call_operand.hbm [shape: bf16[32,128], index: 5, kind: input, shape index: {}]
  %s6 = inlined_call_operand.vmem [shape: f32[1,96], index: 6, kind: input, shape index: {}]
  %s7 = inlined_call_operand.vmem [shape: f32[1,128], index: 7, kind: input, shape index: {}]
  %s8 = inlined_call_operand.hbm [shape: f32[1,16,128], index: 8, kind: output, shape index: {0}]
  %s9 = inlined_call_operand.hbm [shape: f32[16,32], index: 9, kind: output, shape index: {1}]
  %10 = xla_tuple %s8, %s9
  %s11 = sld [smem:[#allocation0]]
  $region70: #{tpu_custom_call.1} parent=0
    _
  %s13 = ssub.s32 1, %s11
  %s14 = scalar_select 0, %s13, %s11
  $region1: #{tpu_custom_call.1} parent=0
    #allocation2 [shape = 'u8[4096]{0}', space=vmem, size = 0x1000, scoped, tag = 'input window, operand 0, single buffered']
    #allocation3 [shape = 's32[1]{0}', space=sflag, size = 0x4, scoped, tag = 'scoped memory for tpu_custom_call.1']
    #allocation4 [shape = 's32[1]{0}', space=sflag, size = 0x4, scoped, tag = 'scoped memory for tpu_custom_call.1']
    #allocation5 [shape = 'u8[8192]{0}', space=vmem, size = 0x2000, scoped, tag = 'input window, operand 2, single buffered']
    #allocation6 [shape = 's32[1]{0}', space=sflag, size = 0x4, scoped, tag = 'scoped memory for tpu_custom_call.1']
    #allocation7 [shape = 'u8[10240]{0}', space=vmem, size = 0x2800, scoped, tag = 'input window, operand 3, single buffered']
    #allocation8 [shape = 'u8[8192]{0}', space=vmem, size = 0x2000, scoped, tag = 'input window, operand 5, single buffered']
    #allocation9 [shape = 's32[1]{0}', space=sflag, size = 0x4, scoped, tag = 'scoped memory for tpu_custom_call.1']
    #allocation10 [shape = 'u8[8192]{0}', space=vmem, size = 0x2000, scoped, tag = 'output window, operand 0, single buffered']
    #allocation11 [shape = 'u8[8192]{0}', space=vmem, size = 0x2000, scoped, tag = 'output window, operand 1, single buffered']
    #allocation12 [shape = 's32[1]{0}', space=sflag, size = 0x4, scoped, tag = 'scoped memory for tpu_custom_call.1']
    %15 = vsyncpa [#allocation3], 0
    %16 = vsyncpa [#allocation6], 0
    %17 = vsyncpa [#allocation9], 0
    %18 = vsyncpa [#allocation4], 0
    %19 = vsyncpa [#allocation12], 0
    // Predicated region
    $region2: #{tpu_custom_call.1} parent=1 // pred_check
      _
    $region3: #{tpu_custom_call.1} parent=1 // pred_check_branch
      %21 = sbr.rel (0) target = $region5
    $region4: #{tpu_custom_call.1} parent=1 // pred_region
      %s23 = ssub.s32 128, 128
      %24 = vsyncadd [#allocation3], %s23
      %s25 = sshll.u32 [#allocation2], 4
      %s26 = int_to_ptr.vmem [resolvable:$true] %s25
      %31 = dma.hbm_to_vmem [thread:$0]  %s0, 128, %s26, [#allocation3], 64, 64, 4
    $region5: #{tpu_custom_call.1} parent=1 // pred_fallthru
      _
    // Predicated region
    $region6: #{tpu_custom_call.1} parent=1 // pred_check
      _
    $region7: #{tpu_custom_call.1} parent=1 // pred_check_branch
      %33 = sbr.rel (0) target = $region9
    $region8: #{tpu_custom_call.1} parent=1 // pred_region
      _
    $region9: #{tpu_custom_call.1} parent=1 // pred_fallthru
      _
    // Predicated region
    $region10: #{tpu_custom_call.1} parent=1 // pred_check
      _
    $region11: #{tpu_custom_call.1} parent=1 // pred_check_branch
      %35 = sbr.rel (0) target = $region13
    $region12: #{tpu_custom_call.1} parent=1 // pred_region
      %s37 = ssub.s32 256, 256
      %38 = vsyncadd [#allocation6], %s37
      %s39 = sshll.u32 [#allocation5], 4
      %s40 = int_to_ptr.vmem [resolvable:$true] %s39
      %45 = dma.hbm_to_vmem [thread:$0]  %s2, 256, %s40, [#allocation6], 128, 128, 8
    $region13: #{tpu_custom_call.1} parent=1 // pred_fallthru
      _
    // Predicated region
    $region14: #{tpu_custom_call.1} parent=1 // pred_check
      _
    $region15: #{tpu_custom_call.1} parent=1 // pred_check_branch
      %47 = sbr.rel (0) target = $region17
    $region16: #{tpu_custom_call.1} parent=1 // pred_region
      %s49 = ssub.s32 320, 320
      %50 = vsyncadd [#allocation6], %s49
      %s51 = sshll.u32 [#allocation7], 4
      %s52 = int_to_ptr.vmem [resolvable:$true] %s51
      %57 = dma.hbm_to_vmem [thread:$0]  %s3, 320, %s52, [#allocation6], 64, 64, 4
    $region17: #{tpu_custom_call.1} parent=1 // pred_fallthru
      _
    // Predicated region
    $region18: #{tpu_custom_call.1} parent=1 // pred_check
      _
    $region19: #{tpu_custom_call.1} parent=1 // pred_check_branch
      %59 = sbr.rel (0) target = $region21
    $region20: #{tpu_custom_call.1} parent=1 // pred_region
      _
    $region21: #{tpu_custom_call.1} parent=1 // pred_fallthru
      _
    // Predicated region
    $region22: #{tpu_custom_call.1} parent=1 // pred_check
      _
    $region23: #{tpu_custom_call.1} parent=1 // pred_check_branch
      %61 = sbr.rel (0) target = $region25
    $region24: #{tpu_custom_call.1} parent=1 // pred_region
      %s63 = ssub.s32 256, 256
      %64 = vsyncadd [#allocation9], %s63
      %s65 = sshll.u32 [#allocation8], 4
      %s66 = int_to_ptr.vmem [resolvable:$true] %s65
      %71 = dma.hbm_to_vmem [thread:$0]  %s5, 256, %s66, [#allocation9], 64, 64, 4
    $region25: #{tpu_custom_call.1} parent=1 // pred_fallthru
      _
    // Predicated region
    $region26: #{tpu_custom_call.1} parent=1 // pred_check
      _
    $region27: #{tpu_custom_call.1} parent=1 // pred_check_branch
      %73 = sbr.rel (0) target = $region29
    $region28: #{tpu_custom_call.1} parent=1 // pred_region
      _
    $region29: #{tpu_custom_call.1} parent=1 // pred_fallthru
      _
    // Predicated region
    $region30: #{tpu_custom_call.1} parent=1 // pred_check
      _
    $region31: #{tpu_custom_call.1} parent=1 // pred_check_branch
      %75 = sbr.rel (0) target = $region33
    $region32: #{tpu_custom_call.1} parent=1 // pred_region
      _
    $region33: #{tpu_custom_call.1} parent=1 // pred_fallthru
      _
    // Predicated region
    $region34: #{tpu_custom_call.1} parent=1 // pred_check
      _
    $region35: #{tpu_custom_call.1} parent=1 // pred_check_branch
      %77 = sbr.rel (0) target = $region37
    $region36: #{tpu_custom_call.1} parent=1 // pred_region
      %78 = dma.done [#allocation3], 128
    $region37: #{tpu_custom_call.1} parent=1 // pred_fallthru
      _
    // Predicated region
    $region38: #{tpu_custom_call.1} parent=1 // pred_check
      _
    $region39: #{tpu_custom_call.1} parent=1 // pred_check_branch
      %80 = sbr.rel (0) target = $region41
    $region40: #{tpu_custom_call.1} parent=1 // pred_region
      %81 = dma.done [#allocation6], 256
    $region41: #{tpu_custom_call.1} parent=1 // pred_fallthru
      _
    // Predicated region
    $region42: #{tpu_custom_call.1} parent=1 // pred_check
      _
    $region43: #{tpu_custom_call.1} parent=1 // pred_check_branch
      %83 = sbr.rel (0) target = $region45
    $region44: #{tpu_custom_call.1} parent=1 // pred_region
      %84 = dma.done [#allocation6], 320
    $region45: #{tpu_custom_call.1} parent=1 // pred_fallthru
      _
    // Predicated region
    $region46: #{tpu_custom_call.1} parent=1 // pred_check
      _
    $region47: #{tpu_custom_call.1} parent=1 // pred_check_branch
      %86 = sbr.rel (0) target = $region49
    $region48: #{tpu_custom_call.1} parent=1 // pred_region
      %87 = dma.done [#allocation9], 256
    $region49: #{tpu_custom_call.1} parent=1 // pred_fallthru
      _
    %p89 = scmp.eq.s32.totalorder 0, 0
    // Predicated region
    $region50: #{tpu_custom_call.1} parent=1 // pred_check
      %p90 = pneg %p89
    $region51: #{tpu_custom_call.1} parent=1 // pred_check_branch
      %92 = sbr.rel (%p90) target = $region53
    $region52: #{tpu_custom_call.1} parent=1 // pred_region
      %v93 = vld [vmem:[#allocation5] sm:$0xff]
      %v94 = vld [vmem:[#allocation5 + $0x8] sm:$0xff]
      %vm95 = vcmask 261120
      %96 = vst.msk [vmem:[#allocation11] sm:$0xff] %vm95, %v93
      %97 = vst.msk [vmem:[#allocation11 + $0x8] sm:$0xff] %vm95, %v94
    $region53: #{tpu_custom_call.1} parent=1 // pred_fallthru
      _
    %v98 = vld [vmem:[#allocation11] sm:$0xff]
    %v99 = vld [vmem:[#allocation11 + $0x8] sm:$0xff]
    %v100 = vld [vmem:[#allocation2] sm:$0xf]
    %v101 = vld [vmem:[#allocation2 + $0x4] sm:$0xf]
    %v102 = vld [vmem:[%s1] sm:$0xf]
    %v103 = vld [vmem:[%s1 + $0x4] sm:$0xf]
    %v106 = vunpack.c.l.b16 %v100
    %v107 = vunpack.c.l.b16 %v101
    %v108 = vpack.c.b16 %v107, %v106
    %v111 = vunpack.c.l.b16 %v102
    %v112 = vunpack.c.l.b16 %v103
    %v113 = vpack.c.b16 %v112, %v111
    %vm115 = vcmask 130048
    %v117 = vsel %vm115, %v108, 0
    %119 = vmatprep.subr.bf16.mxu0 0
    %120 = vmatpush1.bf16.msra.mxu0 0
    %121 = vmatprep.subr.bf16.mxu0 0
    %122 = vmatpush1.bf16.msra.mxu0 0
    %123 = vmatprep.subr.bf16.mxu0 0
    %124 = vmatpush1.bf16.msra.mxu0 0
    %125 = vmatprep.subr.bf16.mxu0 0
    %126 = vmatpush1.bf16.msra.mxu0 0
    %127 = vmatprep.subr.bf16.mxu0 0
    %128 = vmatpush1.bf16.msra.mxu0 0
    %129 = vmatprep.subr.bf16.mxu0 0
    %130 = vmatpush1.bf16.msra.mxu0 0
    %131 = vmatprep.subr.bf16.mxu0 0
    %132 = vmatpush1.bf16.msra.mxu0 0
    %133 = vmatprep.subr.bf16.mxu0 0
    %134 = vmatpush1.bf16.msra.mxu0 %v113
    %135 = vmatprep.subr.bf16.mxu0 0
    %136 = vmatpush2.bf16.msra.mxu0 0
    %137 = vmatprep.subr.bf16.mxu0 0
    %138 = vmatpush2.bf16.msra.mxu0 0
    %139 = vmatprep.subr.bf16.mxu0 0
    %140 = vmatpush2.bf16.msra.mxu0 0
    %141 = vmatprep.subr.bf16.mxu0 0
    %142 = vmatpush2.bf16.msra.mxu0 0
    %143 = vmatprep.subr.bf16.mxu0 0
    %144 = vmatpush2.bf16.msra.mxu0 0
    %145 = vmatprep.subr.bf16.mxu0 0
    %146 = vmatpush2.bf16.msra.mxu0 0
    %147 = vmatprep.subr.bf16.mxu0 0
    %148 = vmatpush2.bf16.msra.mxu0 0
    %149 = vmatprep.subr.bf16.mxu0 0
    %150 = vmatpush2.bf16.msra.mxu0 0
    %151 = vmatprep.mubr.bf16.mxu0 0
    %152 = vmatmul.mubr.bf16.gmra.mxu0 %v117
    %v153 = vpop.f32.mrf.mxu0
    %v154 = vadd.f32 0.0, %v153
    %v155 = vpop.f32.mrf.mxu0
    %v156 = vpop.f32.mrf.mxu0
    %v157 = vadd.f32 0.0, %v156
    %v158 = vpop.f32.mrf.mxu0
    %159 = vdwg.mxu0
    %162 = vrot.lane.b32.xlu0 %v98, 4
    %v163 = vpop.permute.xlu0 %162
    %164 = vrot.lane.b32.xlu0 %v99, 4
    %v165 = vpop.permute.xlu0 %164
    %vm168 = vcmask 31744
    %v169 = vsel %vm168, %v154, %v163
    %v170 = vsel %vm168, %v157, %v165
    %v171 = vpack.c.bf16 %v170, %v169
    %v172 = vld [vmem:[#allocation7] sm:$0xf]
    %v173 = vld [vmem:[#allocation7 + $0x4] sm:$0xf]
    %v174 = vld [vmem:[#allocation7 + $0x8] sm:$0xf]
    %v175 = vld [vmem:[#allocation7 + $0xc] sm:$0xf]
    %v176 = vld [vmem:[#allocation7 + $0x10] sm:$0x3]
    %v177 = vld [vmem:[%s6] sm:$0x1]
    %v179 = vlaneseq
    %v180 = vshrl.u32 %v179, 7
    %v181 = vsub.s32 0, %v180
    %v182 = vrot.slane %v177, %v181
    %v189 = vunpack.c.l.b16 %v172
    %v190 = vunpack.c.l.b16 %v173
    %v191 = vunpack.c.l.b16 %v174
    %v192 = vunpack.c.l.b16 %v175
    %v193 = vunpack.c.l.b16 %v176
    %v194 = vpack.c.b16 %v190, %v189
    %v195 = vpack.c.b16 %v192, %v191
    %v196 = vpack.c.b16 %v193, %v193
    %vm199 = vcmask 293888
    %v201 = vsel %vm199, %v171, 0
    %vm203 = vcmask 1041408
    %v205 = vsel %vm203, %v196, 0
    %207 = vmatprep.subr.bf16.mxu0 0
    %208 = vmatpush1.bf16.msra.mxu0 0
    %209 = vmatprep.subr.bf16.mxu0 0
    %210 = vmatpush1.bf16.msra.mxu0 0
    %211 = vmatprep.subr.bf16.mxu0 0
    %212 = vmatpush1.bf16.msra.mxu0 0
    %213 = vmatprep.subr.bf16.mxu0 0
    %214 = vmatpush1.bf16.msra.mxu0 0
    %215 = vmatprep.subr.bf16.mxu0 0
    %216 = vmatpush1.bf16.msra.mxu0 0
    %217 = vmatprep.subr.bf16.mxu0 0
    %218 = vmatpush1.bf16.msra.mxu0 %v205
    %219 = vmatprep.subr.bf16.mxu0 0
    %220 = vmatpush1.bf16.msra.mxu0 %v195
    %221 = vmatprep.subr.bf16.mxu0 0
    %222 = vmatpush1.bf16.msra.mxu0 %v194
    %223 = vmatprep.subr.bf16.mxu0 0
    %224 = vmatpush2.bf16.msra.mxu0 0
    %225 = vmatprep.subr.bf16.mxu0 0
    %226 = vmatpush2.bf16.msra.mxu0 0
    %227 = vmatprep.subr.bf16.mxu0 0
    %228 = vmatpush2.bf16.msra.mxu0 0
    %229 = vmatprep.subr.bf16.mxu0 0
    %230 = vmatpush2.bf16.msra.mxu0 0
    %231 = vmatprep.subr.bf16.mxu0 0
    %232 = vmatpush2.bf16.msra.mxu0 0
    %233 = vmatprep.subr.bf16.mxu0 0
    %234 = vmatpush2.bf16.msra.mxu0 0
    %235 = vmatprep.subr.bf16.mxu0 0
    %236 = vmatpush2.bf16.msra.mxu0 0
    %237 = vmatprep.subr.bf16.mxu0 0
    %238 = vmatpush2.bf16.msra.mxu0 0
    %239 = vmatprep.mubr.bf16.mxu0 0
    %240 = vmatmul.mubr.bf16.gmra.mxu0 %v201
    %v241 = vpop.f32.mrf.mxu0
    %v242 = vadd.f32 %v182, %v241
    %v243 = vpop.f32.mrf.mxu0
    %v244 = vpop.f32.mrf.mxu0
    %v245 = vadd.f32 %v182, %v244
    %v246 = vpop.f32.mrf.mxu0
    %247 = vdwg.mxu0
    %v248 = vmul.f32 %v242, 0.5
    %v249 = vmul.f32 %v245, 0.5
    %v250 = vtanh.pop %v248
    %v251 = vtanh.pop %v249
    %v252 = vadd.f32 %v250, 1.0
    %v253 = vadd.f32 %v251, 1.0
    %v254 = vmul.f32 %v252, 0.5
    %v255 = vmul.f32 %v253, 0.5
    %258 = vrot.lane.b32.xlu0 %v254, 96
    %v259 = vpop.permute.xlu0 %258
    %260 = vrot.lane.b32.xlu0 %v255, 96
    %v261 = vpop.permute.xlu0 %260
    %v264 = vmul.f32 %v98, %v259
    %v265 = vmul.f32 %v99, %v261
    %v266 = vpack.c.bf16 %v265, %v264
    %v267 = vld [vmem:[%s4] sm:$0xf]
    %v268 = vld [vmem:[%s4 + $0x4] sm:$0xf]
    %v269 = vld [vmem:[%s4 + $0x8] sm:$0xf]
    %v270 = vld [vmem:[%s4 + $0xc] sm:$0xf]
    %v275 = vunpack.c.l.b16 %v267
    %v276 = vunpack.c.l.b16 %v268
    %v277 = vunpack.c.l.b16 %v269
    %v278 = vunpack.c.l.b16 %v270
    %v279 = vpack.c.b16 %v276, %v275
    %v280 = vpack.c.b16 %v278, %v277
    %vm283 = vcmask 261120
    %v285 = vsel %vm283, %v266, 0
    %287 = vmatprep.subr.bf16.mxu0 0
    %288 = vmatpush1.bf16.msra.mxu0 0
    %289 = vmatprep.subr.bf16.mxu0 0
    %290 = vmatpush1.bf16.msra.mxu0 0
    %291 = vmatprep.subr.bf16.mxu0 0
    %292 = vmatpush1.bf16.msra.mxu0 0
    %293 = vmatprep.subr.bf16.mxu0 0
    %294 = vmatpush1.bf16.msra.mxu0 0
    %295 = vmatprep.subr.bf16.mxu0 0
    %296 = vmatpush1.bf16.msra.mxu0 0
    %297 = vmatprep.subr.bf16.mxu0 0
    %298 = vmatpush1.bf16.msra.mxu0 0
    %299 = vmatprep.subr.bf16.mxu0 0
    %300 = vmatpush1.bf16.msra.mxu0 %v280
    %301 = vmatprep.subr.bf16.mxu0 0
    %302 = vmatpush1.bf16.msra.mxu0 %v279
    %303 = vmatprep.subr.bf16.mxu0 0
    %304 = vmatpush2.bf16.msra.mxu0 0
    %305 = vmatprep.subr.bf16.mxu0 0
    %306 = vmatpush2.bf16.msra.mxu0 0
    %307 = vmatprep.subr.bf16.mxu0 0
    %308 = vmatpush2.bf16.msra.mxu0 0
    %309 = vmatprep.subr.bf16.mxu0 0
    %310 = vmatpush2.bf16.msra.mxu0 0
    %311 = vmatprep.subr.bf16.mxu0 0
    %312 = vmatpush2.bf16.msra.mxu0 0
    %313 = vmatprep.subr.bf16.mxu0 0
    %314 = vmatpush2.bf16.msra.mxu0 0
    %315 = vmatprep.subr.bf16.mxu0 0
    %316 = vmatpush2.bf16.msra.mxu0 0
    %317 = vmatprep.subr.bf16.mxu0 0
    %318 = vmatpush2.bf16.msra.mxu0 0
    %319 = vmatprep.mubr.bf16.mxu0 0
    %320 = vmatmul.mubr.bf16.gmra.mxu0 %v285
    %v321 = vpop.f32.mrf.mxu0
    %v322 = vadd.f32 0.0, %v321
    %v323 = vpop.f32.mrf.mxu0
    %v324 = vpop.f32.mrf.mxu0
    %v325 = vadd.f32 0.0, %v324
    %v326 = vpop.f32.mrf.mxu0
    %327 = vdwg.mxu0
    %330 = vrot.lane.b32.xlu0 %v322, 64
    %v331 = vpop.permute.xlu0 %330
    %332 = vrot.lane.b32.xlu0 %v325, 64
    %v333 = vpop.permute.xlu0 %332
    %v336 = vadd.f32 %v242, %v331
    %v337 = vadd.f32 %v245, %v333
    %v338 = vtanh.pop %v336
    %v339 = vtanh.pop %v337
    %v340 = vmul.f32 %v254, %v98
    %v341 = vmul.f32 %v255, %v99
    %v342 = vsub.f32 1.0, %v254
    %v343 = vsub.f32 1.0, %v255
    %346 = vrot.lane.b32.xlu0 %v338, 64
    %v347 = vpop.permute.xlu0 %346
    %348 = vrot.lane.b32.xlu0 %v339, 64
    %v349 = vpop.permute.xlu0 %348
    %v352 = vmul.f32 %v342, %v347
    %v353 = vmul.f32 %v343, %v349
    %v354 = vadd.f32 %v340, %v352
    %v355 = vadd.f32 %v341, %v353
    %356 = vst.msk [vmem:[#allocation11] sm:$0xff] %vm283, %v354
    %357 = vst.msk [vmem:[#allocation11 + $0x8] sm:$0xff] %vm283, %v355
    %v358 = vmax.f32 %v354, 0.0
    %v359 = vmax.f32 %v355, 0.0
    %v360 = vpack.c.bf16 %v359, %v358
    %v361 = vld [vmem:[#allocation8] sm:$0xf]
    %v362 = vld [vmem:[#allocation8 + $0x4] sm:$0xf]
    %v363 = vld [vmem:[#allocation8 + $0x8] sm:$0xf]
    %v364 = vld [vmem:[#allocation8 + $0xc] sm:$0xf]
    %v365 = vld [vmem:[%s7] sm:$0x1]
    %v367 = vlaneseq
    %v368 = vshrl.u32 %v367, 7
    %v369 = vsub.s32 0, %v368
    %v370 = vrot.slane %v365, %v369
    %v376 = vunpack.c.l.b16 %v361
    %v377 = vunpack.c.l.b16 %v362
    %v378 = vunpack.c.l.b16 %v363
    %v379 = vunpack.c.l.b16 %v364
    %v380 = vpack.c.b16 %v377, %v376
    %v381 = vpack.c.b16 %v379, %v378
    %v385 = vsel %vm283, %v360, 0
    %387 = vmatprep.subr.bf16.mxu0 0
    %388 = vmatpush1.bf16.msra.mxu0 0
    %389 = vmatprep.subr.bf16.mxu0 0
    %390 = vmatpush1.bf16.msra.mxu0 0
    %391 = vmatprep.subr.bf16.mxu0 0
    %392 = vmatpush1.bf16.msra.mxu0 0
    %393 = vmatprep.subr.bf16.mxu0 0
    %394 = vmatpush1.bf16.msra.mxu0 0
    %395 = vmatprep.subr.bf16.mxu0 0
    %396 = vmatpush1.bf16.msra.mxu0 0
    %397 = vmatprep.subr.bf16.mxu0 0
    %398 = vmatpush1.bf16.msra.mxu0 0
    %399 = vmatprep.subr.bf16.mxu0 0
    %400 = vmatpush1.bf16.msra.mxu0 %v381
    %401 = vmatprep.subr.bf16.mxu0 0
    %402 = vmatpush1.bf16.msra.mxu0 %v380
    %403 = vmatprep.subr.bf16.mxu0 0
    %404 = vmatpush2.bf16.msra.mxu0 0
    %405 = vmatprep.subr.bf16.mxu0 0
    %406 = vmatpush2.bf16.msra.mxu0 0
    %407 = vmatprep.subr.bf16.mxu0 0
    %408 = vmatpush2.bf16.msra.mxu0 0
    %409 = vmatprep.subr.bf16.mxu0 0
    %410 = vmatpush2.bf16.msra.mxu0 0
    %411 = vmatprep.subr.bf16.mxu0 0
    %412 = vmatpush2.bf16.msra.mxu0 0
    %413 = vmatprep.subr.bf16.mxu0 0
    %414 = vmatpush2.bf16.msra.mxu0 0
    %415 = vmatprep.subr.bf16.mxu0 0
    %416 = vmatpush2.bf16.msra.mxu0 0
    %417 = vmatprep.subr.bf16.mxu0 0
    %418 = vmatpush2.bf16.msra.mxu0 0
    %419 = vmatprep.mubr.bf16.mxu0 0
    %420 = vmatmul.mubr.bf16.gmra.mxu0 %v385
    %v421 = vpop.f32.mrf.mxu0
    %v422 = vadd.f32 %v370, %v421
    %v423 = vpop.f32.mrf.mxu0
    %v424 = vpop.f32.mrf.mxu0
    %v425 = vadd.f32 %v370, %v424
    %v426 = vpop.f32.mrf.mxu0
    %427 = vdwg.mxu0
    %428 = vmax.xlane.f32.xlu0 %v422
    %v429 = vpop.xlane.xlu0 %428
    %430 = vmax.xlane.f32.xlu0 %v425
    %v431 = vpop.xlane.xlu0 %430
    %v432 = vsub.f32 %v422, %v429
    %v433 = vsub.f32 %v425, %v431
    %v434 = vmul.f32 %v432, 1.442695
    %v435 = vpow.pop %v434
    %v436 = vmul.f32 %v433, 1.442695
    %v437 = vpow.pop %v436
    %438 = vadd.xlane.f32.xlu0 %v435
    %v439 = vpop.xlane.xlu0 %438
    %440 = vadd.xlane.f32.xlu0 %v437
    %v441 = vpop.xlane.xlu0 %440
    %v442 = vrcp.pop %v439
    %v443 = vrcp.pop %v441
    %v444 = vmul.f32 %v435, %v442
    %v445 = vmul.f32 %v437, %v443
    %446 = vst [vmem:[#allocation10] sm:$0xff] %v444
    %447 = vst [vmem:[#allocation10 + $0x8] sm:$0xff] %v445
    // Predicated region
    $region54: #{tpu_custom_call.1} parent=1 // pred_check
      _
    $region55: #{tpu_custom_call.1} parent=1 // pred_check_branch
      %449 = sbr.rel (0) target = $region57
    $region56: #{tpu_custom_call.1} parent=1 // pred_region
      %s451 = ssub.s32 256, 256
      %452 = vsyncadd [#allocation4], %s451
      %s453 = sshll.u32 [#allocation10], 4
      %s454 = int_to_ptr.vmem [resolvable:$true] %s453
      %459 = dma.vmem_to_hbm [thread:$0]  %s454, 256, %s8, [#allocation4], 128, 128, 8
    $region57: #{tpu_custom_call.1} parent=1 // pred_fallthru
      _
    // Predicated region
    $region58: #{tpu_custom_call.1} parent=1 // pred_check
      _
    $region59: #{tpu_custom_call.1} parent=1 // pred_check_branch
      %461 = sbr.rel (0) target = $region61
    $region60: #{tpu_custom_call.1} parent=1 // pred_region
      %s463 = ssub.s32 256, 256
      %464 = vsyncadd [#allocation12], %s463
      %s465 = sshll.u32 [#allocation11], 4
      %s466 = int_to_ptr.vmem [resolvable:$true] %s465
      %471 = dma.vmem_to_hbm [thread:$0]  %s466, 256, %s9, [#allocation12], 128, 128, 8
    $region61: #{tpu_custom_call.1} parent=1 // pred_fallthru
      _
    // Predicated region
    $region62: #{tpu_custom_call.1} parent=1 // pred_check
      _
    $region63: #{tpu_custom_call.1} parent=1 // pred_check_branch
      %473 = sbr.rel (0) target = $region65
    $region64: #{tpu_custom_call.1} parent=1 // pred_region
      %474 = dma.done [#allocation4], 256
    $region65: #{tpu_custom_call.1} parent=1 // pred_fallthru
      _
    // Predicated region
    $region66: #{tpu_custom_call.1} parent=1 // pred_check
      _
    $region67: #{tpu_custom_call.1} parent=1 // pred_check_branch
      %476 = sbr.rel (0) target = $region69
    $region68: #{tpu_custom_call.1} parent=1 // pred_region
      %477 = dma.done [#allocation12], 256
    $region69: #{tpu_custom_call.1} parent=1 // pred_fallthru
      _
    %478 = vsyncpa [#allocation3], 1
    %479 = vsyncpa [#allocation6], 1
    %480 = vsyncpa [#allocation9], 1
    %481 = vsyncpa [#allocation4], 1
    %482 = vsyncpa [#allocation12], 1

</llo_original>
